<compile_context>
chip_gen: v7x
topology: tpu7x:2x2x1
jax: 0.10.0
libtpu: 0.0.40
codegen_flags: <defaults>
</compile_context>

<pallas_src>
import functools

import jax
import jax.numpy as jnp
from jax.experimental import pallas as pl
from jax.experimental.pallas import tpu as pltpu

_TINY_BYTES = 1 << 20    # whole tensor fused into a single grid step below this
_BLOCK_BYTES = 8 << 20   # target bytes for one (tn, tc, tl) input buffer
_VMEM_LIMIT = 32 << 20   # explicit scoped-VMEM limit: raises v5e's 16 MiB
                         # default, matches v6e/v7x defaults, covers 2x8 MiB
                         # double-buffered inputs + output/scratch with room.


def _round_up(v, m):
    return (v + m - 1) // m * m


def _sublane(itemsize):
    # Second-minor tiling granularity: 8 rows (f32), 16 (bf16), 32 (int8).
    return max(8, 32 // itemsize)


def _padded_block_bytes(tn, tc, tl, itemsize):
    """Bytes one (tn, tc, tl) VMEM buffer really occupies after (8,128) tiling."""
    sub = _sublane(itemsize)
    return tn * _round_up(tc, sub) * _round_up(tl, 128) * itemsize


def _choose_tiles(N, C, L, itemsize):
    """Pick (tn, tc, tl) honouring block legality and the VMEM byte budget.

    Legality (last-two-dims rule, for both the 3-D input block and the 2-D
    output block): tl % 128 == 0 or tl == L; tc % 128 == 0 or tc == C;
    tn % 8 == 0 or tn == N.
    """
    total = N * C * L * itemsize
    if total <= _TINY_BYTES:
        # Genuinely tiny: one fused grid step, no per-step overhead at all.
        return N, C, L

    sub = _sublane(itemsize)
    # Aim for at least ~2 blocks so a 'parallel' axis can split across v7x's
    # two TensorCores, but never exceed the per-buffer budget.
    budget = min(_BLOCK_BYTES, max(_TINY_BYTES // 2, (total + 1) // 2))

    min_tc = C if C <= 128 else 128
    min_tn = N if N <= 8 else 8

    # 1) Length axis: prefer the full last dim (contiguous DMA, no masking,
    #    single reduction step); only tile L when even a minimal slab is big.
    if L <= 128 or _padded_block_bytes(min_tn, min_tc, L, itemsize) <= budget:
        tl = L
    else:
        tl = (budget // (min_tn * _round_up(min_tc, sub) * itemsize)) // 128 * 128
        tl = max(128, min(tl, (L // 128) * 128))

    # 2) Channel axis (output lane axis): as wide as the budget allows.
    cap_c = budget // max(1, min_tn * _round_up(tl, 128) * itemsize)
    tc = C if cap_c >= C else max(min_tc, (cap_c // 128) * 128)

    # 3) Batch axis: fuse rows up to the budget.
    cap_n = budget // max(1, _round_up(tc, sub) * _round_up(tl, 128) * itemsize)
    tn = N if cap_n >= N else max(min_tn, (cap_n // 8) * 8)

    return tn, tc, tl


def _avgpool_full_l_kernel(x_ref, o_ref, *, inv_l):
    """Single reduction step: the block covers the whole L axis."""
    s = jnp.sum(x_ref[...], axis=-1, dtype=jnp.float32)
    o_ref[...] = (s * jnp.float32(inv_l)).astype(o_ref.dtype)


def _avgpool_reduce_kernel(x_ref, o_ref, acc_ref, *, true_l, tl, inv_l, mask_l):
    """Tiled reduction over L (innermost, 'arbitrary' grid axis)."""
    l = pl.program_id(2)
    nl = pl.num_programs(2)

    @pl.when(l == 0)
    def _init():
        acc_ref[...] = jnp.zeros_like(acc_ref)

    if mask_l:
        # Only the last L tile can overrun the true length; keep every other
        # step on the pure load+reduce path (no per-step VPU mask work).
        @pl.when(l < nl - 1)
        def _body():
            acc_ref[...] += jnp.sum(x_ref[...], axis=-1, dtype=jnp.float32)

        @pl.when(l == nl - 1)
        def _masked_body():
            x = x_ref[...]
            off = l * tl + jax.lax.broadcasted_iota(jnp.int32, x_ref.shape, 2)
            # Mask BEFORE the sum so padded/garbage DMA lanes never pollute it.
            x = jnp.where(off < true_l, x, jnp.zeros_like(x))
            acc_ref[...] += jnp.sum(x, axis=-1, dtype=jnp.float32)
    else:
        acc_ref[...] += jnp.sum(x_ref[...], axis=-1, dtype=jnp.float32)

    @pl.when(l == nl - 1)
    def _finalize():
        # Multiply by 1/L on the VPU instead of dividing; cast to output dtype.
        o_ref[...] = (acc_ref[...] * jnp.float32(inv_l)).astype(o_ref.dtype)


def avg_pool(x):
    """AvgPool over the last axis: [N, C, L] -> [N, C] (mean over L)."""
    # TODO(synk): non-default stride/padding of the wrapped AvgPool1d are not
    # supported; only the module's documented path (global mean over L).
    N, C, L = x.shape
    itemsize = jnp.dtype(x.dtype).itemsize
    tn, tc, tl = _choose_tiles(N, C, L, itemsize)

    n_tiles = pl.cdiv(N, tn)
    c_tiles = pl.cdiv(C, tc)
    l_tiles = pl.cdiv(L, tl)
    inv_l = 1.0 / float(L)

    cost = pl.CostEstimate(
        flops=N * C * L,
        transcendentals=0,
        bytes_accessed=N * C * L * itemsize + N * C * itemsize,
    )

    if l_tiles == 1:
        # Common case after the full-L preference: one reduction step per
        # output tile, no scratch, no masking, 2-D parallel grid.
        kernel = functools.partial(_avgpool_full_l_kernel, inv_l=inv_l)
        grid = (n_tiles, c_tiles)
        in_specs = [pl.BlockSpec((tn, tc, tl), lambda n, c: (n, c, 0))]
        out_specs = pl.BlockSpec((tn, tc), lambda n, c: (n, c))
        scratch_shapes = []
        dims = ("parallel", "parallel")
    else:
        # Very long L: tile the reduction axis (innermost, 'arbitrary') with a
        # resident f32 accumulator; output block index ignores l.
        kernel = functools.partial(
            _avgpool_reduce_kernel,
            true_l=L, tl=tl, inv_l=inv_l, mask_l=(L % tl) != 0)
        grid = (n_tiles, c_tiles, l_tiles)
        in_specs = [pl.BlockSpec((tn, tc, tl), lambda n, c, l: (n, c, l))]
        out_specs = pl.BlockSpec((tn, tc), lambda n, c, l: (n, c))
        scratch_shapes = [pltpu.VMEM((tn, tc), jnp.float32)]
        dims = ("parallel", "parallel", "arbitrary")

    return pl.pallas_call(
        kernel,
        out_shape=jax.ShapeDtypeStruct((N, C), x.dtype),
        grid_spec=pltpu.PrefetchScalarGridSpec(
            num_scalar_prefetch=0,
            grid=grid,
            in_specs=in_specs,
            out_specs=out_specs,
            scratch_shapes=scratch_shapes,
        ),
        compiler_params=pltpu.CompilerParams(
            dimension_semantics=dims,
            vmem_limit_bytes=_VMEM_LIMIT,
        ),
        cost_estimate=cost,
    )(x)


if __name__ == "__main__":
    key = jax.random.PRNGKey(0)

    # Small shape matching the module spec: [batch, hidden/channels, seq_len].
    N, C, L = 2, 4, 16
    x = jax.random.normal(key, (N, C, L), dtype=jnp.float32)
    out = avg_pool(x)
    jax.block_until_ready(out)
    ref = jnp.mean(x, axis=-1)
    assert out.shape == (N, C), out.shape
    assert jnp.allclose(out, ref, atol=1e-5, rtol=1e-5)

    # Medium shape: exercises the full-L path with multiple C tiles
    # (partial last C tile, lane-dense output blocks).
    k2 = jax.random.PRNGKey(1)
    x2 = jax.random.normal(k2, (4, 640, 1300), dtype=jnp.float32)
    out2 = avg_pool(x2)
    jax.block_until_ready(out2)
    ref2 = jnp.mean(x2, axis=-1)
    assert out2.shape == (4, 640), out2.shape
    assert jnp.allclose(out2, ref2, atol=1e-4, rtol=1e-4)

    # Very long L: exercises the tiled-reduction kernel with the masked
    # final L tile (L not a multiple of tl).
    k3 = jax.random.PRNGKey(2)
    x3 = jax.random.normal(k3, (1, 8, 65600), dtype=jnp.float32)
    out3 = avg_pool(x3)
    jax.block_until_ready(out3)
    ref3 = jnp.mean(x3, axis=-1)
    assert out3.shape == (1, 8), out3.shape
    assert jnp.allclose(out3, ref3, atol=1e-4, rtol=1e-4)

    print("KERNEL_OK")
</pallas_src>

<mosaic_0001>
module attributes {stable_mosaic.version = 11 : i64} {
  func.func @_avgpool_full_l_kernel(%arg0: i32, %arg1: i32, %arg2: memref<2x4x16xf32, #tpu.memory_space<vmem>>, %arg3: memref<2x4xf32, #tpu.memory_space<vmem>>) attributes {dimension_semantics = [#tpu.dimension_semantics<parallel>, #tpu.dimension_semantics<parallel>], iteration_bounds = array<i64: 1, 1>, scalar_prefetch = 0 : i64, scratch_operands = 0 : i64, tpu.core_type = #tpu.core_type<tc>, window_params = [{transform_indices = @transform_0, window_bounds = array<i64: 2, 4, 16>}, {transform_indices = @transform_1, window_bounds = array<i64: 2, 4>}]} {
    %c0 = arith.constant 0 : index
    %c0_0 = arith.constant 0 : index
    %c0_1 = arith.constant 0 : index
    %0 = vector.load %arg2[%c0, %c0_0, %c0_1] : memref<2x4x16xf32, #tpu.memory_space<vmem>>, vector<2x4x16xf32>
    %cst = arith.constant dense<0.000000e+00> : vector<2x4xf32>
    %1 = vector.multi_reduction <add>, %0, %cst [2] : vector<2x4x16xf32> to vector<2x4xf32>
    %cst_2 = arith.constant 6.250000e-02 : f32
    %2 = vector.broadcast %cst_2 : f32 to vector<2x4xf32>
    %3 = arith.mulf %1, %2 : vector<2x4xf32>
    %c0_3 = arith.constant 0 : index
    %c0_4 = arith.constant 0 : index
    %4 = vector.load %arg3[%c0_3, %c0_4] : memref<2x4xf32, #tpu.memory_space<vmem>>, vector<2x4xf32>
    tpu.vector_store %arg3[%c0_3, %c0_4], %3 {strides = array<i32>} : memref<2x4xf32, #tpu.memory_space<vmem>>, vector<2x4xf32>,
    return
  }
  func.func @transform_0(%arg0: i32, %arg1: i32) -> (i32, i32, i32) {
    %c0_i32 = arith.constant 0 : i32
    %c0_i32_0 = arith.constant 0 : i32
    return %arg0, %arg1, %c0_i32 : i32, i32, i32
  }
  func.func @transform_1(%arg0: i32, %arg1: i32) -> (i32, i32) {
    %c0_i32 = arith.constant 0 : i32
    return %arg0, %arg1 : i32, i32
  }
}

</mosaic_0001>

<llo_original>
// kernel: tpu_custom_call.1
$region0: #{tpu_custom_call.1}
  #allocation0 [shape = 'u32[]', space=smem, size = 0x4, offset = 0x4, fixed_abs, tag = 'smem constant byte address 0x4 - core index']
  #allocation1 [shape = 'u32[144,128]{1,0:T(1,128)}', space=vmem, size = 0x12000, scoped, tag = 'internal scratch']
  %s0 = inlined_call_operand.hbm [shape: f32[2,4,16], index: 0, kind: input, shape index: {}]
  %s1 = inlined_call_operand.hbm [shape: f32[2,4], index: 1, kind: output, shape index: {}]
  %s2 = sld [smem:[#allocation0]]
  $region18: #{tpu_custom_call.1} parent=0
    _
  %s4 = ssub.s32 1, %s2
  %s5 = scalar_select 0, %s4, %s2
  $region1: #{tpu_custom_call.1} parent=0
    #allocation2 [shape = 'u8[4096]{0}', space=vmem, size = 0x1000, scoped, tag = 'input window, operand 0, single buffered']
    #allocation3 [shape = 's32[1]{0}', space=sflag, size = 0x4, scoped, tag = 'scoped memory for tpu_custom_call.1']
    #allocation4 [shape = 's32[1]{0}', space=sflag, size = 0x4, scoped, tag = 'scoped memory for tpu_custom_call.1']
    #allocation5 [shape = 'u8[1024]{0}', space=vmem, size = 0x400, scoped, tag = 'output window, operand 0, single buffered']
    %6 = vsyncpa [#allocation3], 0
    %7 = vsyncpa [#allocation4], 0
    // Predicated region
    $region2: #{tpu_custom_call.1} parent=1 // pred_check
      _
    $region3: #{tpu_custom_call.1} parent=1 // pred_check_branch
      %9 = sbr.rel (0) target = $region5
    $region4: #{tpu_custom_call.1} parent=1 // pred_region
      %s11 = ssub.s32 128, 128
      %12 = vsyncadd [#allocation3], %s11
      %s13 = sshll.u32 [#allocation2], 4
      %s14 = int_to_ptr.vmem [resolvable:$true] %s13
      %19 = dma.hbm_to_vmem [thread:$0]  %s0, 128, %s14, [#allocation3], 64, 64, 4
    $region5: #{tpu_custom_call.1} parent=1 // pred_fallthru
      _
    // Predicated region
    $region6: #{tpu_custom_call.1} parent=1 // pred_check
      _
    $region7: #{tpu_custom_call.1} parent=1 // pred_check_branch
      %21 = sbr.rel (0) target = $region9
    $region8: #{tpu_custom_call.1} parent=1 // pred_region
      %22 = dma.done [#allocation3], 128
    $region9: #{tpu_custom_call.1} parent=1 // pred_fallthru
      _
    %v23 = vld [vmem:[#allocation2] sm:$0xf]
    %v24 = vld [vmem:[#allocation2 + $0x4] sm:$0xf]
    %vm25 = vcmask 125952
    %v26 = vsel %vm25, %v23, 0.0
    %27 = vadd.xlane.f32.xlu0 %v26
    %v28 = vpop.xlane.xlu0 %27
    %v29 = vsel %vm25, %v24, 0.0
    %30 = vadd.xlane.f32.xlu0 %v29
    %v31 = vpop.xlane.xlu0 %30
    %v32 = vmul.f32 %v28, 0.0625
    %v33 = vmul.f32 %v31, 0.0625
    %v36 = vlaneseq
    %v37 = vand.u32 %v36, 127
    %v38 = vlaneseq
    %v39 = vshrl.u32 %v38, 7
    %v40 = vsub.s32 %v37, %v39
    %v41 = vrot.slane %v32, %v40
    %v42 = vlaneseq
    %v43 = vshrl.u32 %v42, 7
    %v44 = vsub.s32 %v37, %v43
    %v45 = vrot.slane %v33, %v44
    %vm46 = vcmask 1041409
    %v47 = vsel %vm46, %v45, %v41
    %vm49 = vcmask 25600
    %50 = vst.msk [vmem:[#allocation5] sm:$0x3] %vm49, %v47
    // Predicated region
    $region10: #{tpu_custom_call.1} parent=1 // pred_check
      _
    $region11: #{tpu_custom_call.1} parent=1 // pred_check_branch
      %52 = sbr.rel (0) target = $region13
    $region12: #{tpu_custom_call.1} parent=1 // pred_region
      %s54 = ssub.s32 32, 32
      %55 = vsyncadd [#allocation4], %s54
      %s57 = sshll.u32 [#allocation5], 4
      %s58 = int_to_ptr.vmem [resolvable:$true] %s57
      %60 = dma.vmem_to_hbm [thread:$0]  %s58, 32, %s1, [#allocation4]
    $region13: #{tpu_custom_call.1} parent=1 // pred_fallthru
      _
    // Predicated region
    $region14: #{tpu_custom_call.1} parent=1 // pred_check
      _
    $region15: #{tpu_custom_call.1} parent=1 // pred_check_branch
      %62 = sbr.rel (0) target = $region17
    $region16: #{tpu_custom_call.1} parent=1 // pred_region
      %63 = dma.done [#allocation4], 32
    $region17: #{tpu_custom_call.1} parent=1 // pred_fallthru
      _
    %64 = vsyncpa [#allocation3], 1
    %65 = vsyncpa [#allocation4], 1

</llo_original>
